<compile_context>
chip_gen: v7x
topology: tpu7x:2x2x1
jax: 0.10.0
libtpu: 0.0.40
codegen_flags: <defaults>
</compile_context>

<pallas_src>
import jax
import jax.numpy as jnp
from jax.experimental import pallas as pl
from jax.experimental.pallas import tpu as pltpu


def _vmem_budgets():
    """(block-residency budget, scoped vmem limit), generation aware (v7x: 64 MiB VMEM/TC)."""
    phys = 128 << 20
    try:
        info = pltpu.get_tpu_info()
        phys = int(getattr(info, "vmem_capacity_bytes", phys))
    except Exception:
        pass
    if phys <= (64 << 20):               # v7x-class TensorCore
        return 24 << 20, 32 << 20
    return 36 << 20, 48 << 20            # v5e / v6e (128 MiB physical VMEM)


def _round_up(x, m):
    return -(-x // m) * m


def _choose_tiling(B, Cout, Cin, W1, W2, x1_isz, x2_isz, out_isz, resid_budget):
    """Pick (Bb, wt, n_w): batch fold, lane tile, number of W tiles."""
    W = max(W1, W2)
    # Streamed bytes per lane per batch (x1 in + x2 in + out).
    lane_bytes = Cout * x1_isz + Cin * x2_isz + Cout * out_isz
    # VMEM residency per lane per batch: triple-buffered inputs, double-buffered output.
    buf_lane_bytes = 3 * (Cout * x1_isz + Cin * x2_isz) + 2 * Cout * out_isz
    target = 4 << 20                     # aim for multi-MiB steps to amortize ~0.35us/step
    max_bb = 32                          # cap the static in-kernel batch unroll

    # Full-W lane block => fully contiguous per-channel DMA rows, no divisibility issues.
    # (When W1 != W2 and W is not 128-aligned the shorter operand's block can't equal its
    #  own full extent, so round the lane block up to a 128 multiple; tails are masked.)
    wt_full = W if (W1 == W2 or W % 128 == 0) else _round_up(W, 128)

    if wt_full * buf_lane_bytes <= resid_budget:
        wt = wt_full
        divisors = [d for d in range(1, B + 1) if B % d == 0 and d <= max_bb]
        bb = 1
        for d in divisors:               # ascending: smallest batch fold hitting the target
            if d * wt * buf_lane_bytes > resid_budget:
                break
            bb = d
            if d * wt * lane_bytes >= target:
                break
        n_w = 1
        # Keep >=2 grid steps when the work is non-trivial (v7x has 2 TensorCores).
        if B // bb == 1 and n_w == 1:
            if bb > 1 and wt * lane_bytes >= (512 << 10):
                bb = max(d for d in divisors if d < bb)
            elif bb == 1 and B == 1 and W >= 256 and wt * lane_bytes >= (1 << 20):
                wt = _round_up(-(-W // 2), 128)
                n_w = -(-W // wt)
        return bb, wt, n_w

    # Full-W residency exceeds the budget: tile the lane axis (Bb = 1) with the largest
    # 128-multiple tile fitting the budget; the grid uses cdiv + masked boundary block.
    wt = max(128, (resid_budget // buf_lane_bytes) // 128 * 128)
    wt = min(wt, _round_up(W, 128))
    return 1, wt, -(-W // wt)


def _make_kernel(Bb, wt, W1, W2):
    W = max(W1, W2)
    pad1, pad2 = W1 < W, W2 < W
    e1, e2 = (W1 - 1) % wt, (W2 - 1) % wt   # edge-column local index inside the clamped block

    def kernel(w_ref, b_ref, x1_ref, x2_ref, o_ref):
        w = w_ref[...]                       # (Cout, Cin), pre-normalized
        bias = b_ref[...]                    # (Cout, 1) f32
        if pad1 or pad2:
            j = pl.program_id(1)
            pos = j * wt + jax.lax.broadcasted_iota(jnp.int32, (1, wt), 1)
            m1 = pos >= W1
            m2 = pos >= W2
        for bi in range(Bb):                 # Bb is small & static (<= 32)
            x1b = x1_ref[bi]                 # (Cout, wt)
            x2b = x2_ref[bi]                 # (Cin,  wt)
            if pad1:                         # replicate-pad x1 in-register (no HBM pad pass)
                x1b = jnp.where(m1, x1b[:, e1:e1 + 1], x1b)
            if pad2:                         # 1x1 conv commutes with replicate padding
                x2b = jnp.where(m2, x2b[:, e2:e2 + 1], x2b)
            y = jnp.dot(w, x2b, preferred_element_type=jnp.float32)     # MXU, f32 accum
            o_ref[bi] = (y + bias + x1b.astype(jnp.float32)).astype(o_ref.dtype)

    return kernel


def _spec(shape, index_map, *, buffers=None):
    """BlockSpec with optional N-deep pipelining; degrades gracefully if unsupported."""
    if buffers is not None and hasattr(pl, "Buffered"):
        try:
            return pl.BlockSpec(shape, index_map, pipeline_mode=pl.Buffered(buffers))
        except TypeError:
            pass
    return pl.BlockSpec(shape, index_map)


def enc_combiner_cell_1d(x1, x2, weight, log_weight_norm, bias, *, resid_budget_bytes=None):
    """x1: (B, Cout, W1), x2: (B, Cin, W2) -> (B, Cout, max(W1, W2)).

    out = x1 + conv1x1_weightnorm(x2) + bias, with replicate padding of the shorter
    spatial axis (matching EncCombinerCell1d.forward).
    """
    B, Cout_x1, W1 = x1.shape
    B2, Cin, W2 = x2.shape
    Cout, Cin_w = weight.shape
    assert B == B2 and Cin_w == Cin and Cout_x1 == Cout
    W = max(W1, W2)

    out_dtype = jnp.promote_types(x1.dtype, x2.dtype)
    compute_dtype = x2.dtype
    x1_isz = jnp.dtype(x1.dtype).itemsize
    x2_isz = jnp.dtype(x2.dtype).itemsize
    out_isz = jnp.dtype(out_dtype).itemsize

    # Hoisted weight normalization (O(Cout*Cin), f32) -- the kernel sees the final weight.
    w32 = weight.astype(jnp.float32)
    wn = jnp.sqrt(jnp.sum(w32 * w32, axis=1, keepdims=True))                 # (Cout, 1)
    w_norm = (jnp.exp(log_weight_norm.reshape(Cout, 1).astype(jnp.float32))
              * w32 / (wn + 1e-5)).astype(compute_dtype)                     # (Cout, Cin)
    bias2d = bias.reshape(Cout, 1).astype(jnp.float32)

    resid_budget, vmem_cap = _vmem_budgets()
    if resid_budget_bytes is not None:
        resid_budget = min(resid_budget, int(resid_budget_bytes))

    Bb, wt, n_w = _choose_tiling(B, Cout, Cin, W1, W2, x1_isz, x2_isz, out_isz, resid_budget)
    n_b = B // Bb
    total_steps = n_b * n_w
    bufs = 3 if total_steps >= 3 else None    # triple-buffer streamed inputs when useful

    # Clamped lane-block index maps implement replicate padding without an HBM pad pass:
    # W tiles past the short operand's extent re-read its last valid block and the kernel
    # selects the edge column for out-of-range lanes.
    def x_index_map(w_len):
        last_blk = (w_len - 1) // wt
        if last_blk >= n_w - 1:               # never clamps -> keep the map trivial
            return lambda b, j: (b, 0, j)
        return lambda b, j: (b, 0, jnp.minimum(j, last_blk))

    in_specs = [
        pl.BlockSpec((Cout, Cin), lambda b, j: (0, 0)),     # normalized weight (resident)
        pl.BlockSpec((Cout, 1), lambda b, j: (0, 0)),       # bias (resident)
        _spec((Bb, Cout, wt), x_index_map(W1), buffers=bufs),   # x1 stream
        _spec((Bb, Cin, wt), x_index_map(W2), buffers=bufs),    # x2 stream
    ]
    # Output kept at default (double) buffering; boundary tiles are masked stores.
    out_spec = pl.BlockSpec((Bb, Cout, wt), lambda b, j: (b, 0, j))

    n_in_buf = bufs if bufs is not None else 2
    resid = (Bb * wt * (n_in_buf * (Cout * x1_isz + Cin * x2_isz) + 2 * Cout * out_isz)
             + 2 * (Cout * Cin * x2_isz + Cout * 4))
    vmem_limit = int(min(max(resid + (8 << 20), 16 << 20), vmem_cap))

    cost = pl.CostEstimate(
        flops=int(2 * B * Cout * Cin * W + 2 * B * Cout * W),
        transcendentals=0,
        bytes_accessed=int(B * (Cout * W1 * x1_isz + Cin * W2 * x2_isz + Cout * W * out_isz)
                           + Cout * Cin * x2_isz + Cout * 4),
    )

    out = pl.pallas_call(
        _make_kernel(Bb, wt, W1, W2),
        out_shape=jax.ShapeDtypeStruct((B, Cout, W), out_dtype),
        grid=(n_b, n_w),
        in_specs=in_specs,
        out_specs=out_spec,
        compiler_params=pltpu.CompilerParams(
            dimension_semantics=("parallel", "parallel"),
            vmem_limit_bytes=vmem_limit),
        cost_estimate=cost,
    )(w_norm, bias2d, x1, x2)
    return out


def _reference(x1, x2, weight, log_weight_norm, bias):
    """Pure-JAX reference reproducing the PyTorch forward."""
    Cout, Cin = weight.shape
    wn = jnp.sqrt(jnp.sum(weight * weight, axis=1, keepdims=True))
    w_norm = jnp.exp(log_weight_norm.reshape(Cout, 1)) * weight / (wn + 1e-5)
    y = jnp.einsum("oc,bcw->bow", w_norm, x2) + bias.reshape(1, Cout, 1)
    W1, W2 = x1.shape[2], y.shape[2]
    if W1 < W2:
        x1 = jnp.pad(x1, ((0, 0), (0, 0), (0, W2 - W1)), mode="edge")
    elif W2 < W1:
        y = jnp.pad(y, ((0, 0), (0, 0), (0, W1 - W2)), mode="edge")
    return x1 + y


def _make_params(key, Cout, Cin):
    k_w, k_b = jax.random.split(key)
    # Shapes as in nn.Conv1d(Cin, Cout, 1, bias=True); kernel dim squeezed.
    weight3d = jax.random.normal(k_w, (Cout, Cin, 1), dtype=jnp.float32) * 0.1
    bias = jax.random.normal(k_b, (Cout,), dtype=jnp.float32) * 0.1
    weight = weight3d[:, :, 0]
    # log_weight_norm init = log(||w||_{dims 1,2} + 0.01), as in Conv1D.__init__
    init_norm = jnp.sqrt(jnp.sum(weight3d * weight3d, axis=(1, 2)))
    log_weight_norm = jnp.log(init_norm + 0.01)
    return weight, log_weight_norm, bias


# TODO(synk): Conv1D's data_init branch (data-dependent bias/log_weight_norm init with a
# distributed average_tensor) is a training-time initialization path and is not implemented.

if __name__ == "__main__":
    key = jax.random.PRNGKey(0)
    k1, k2, k3, k4, k5, k6 = jax.random.split(key, 6)

    def check(x1, x2, weight, lwn, bias, **kw):
        out = jax.block_until_ready(enc_combiner_cell_1d(x1, x2, weight, lwn, bias, **kw))
        ref = _reference(x1, x2, weight, lwn, bias)
        assert out.shape == ref.shape, (out.shape, ref.shape)
        assert jnp.allclose(out, ref, atol=1e-5, rtol=1e-5), \
            float(jnp.max(jnp.abs(out - ref)))

    # 1) small module-like shapes (B=2, Cin2=4, Cout=8, W=16): batch-folded single step
    w1_, lwn1, b1 = _make_params(k1, 8, 4)
    check(jax.random.normal(k2, (2, 8, 16), jnp.float32),
          jax.random.normal(k3, (2, 4, 16), jnp.float32), w1_, lwn1, b1)

    # 2) mismatched spatial sizes: full-W contiguous block + in-kernel replicate pad of x2
    w2_, lwn2, b2 = _make_params(k4, 16, 8)
    check(jax.random.normal(k5, (2, 16, 1280), jnp.float32),
          jax.random.normal(k6, (2, 8, 1024), jnp.float32), w2_, lwn2, b2)

    # 3) awkward non-128 W with mismatch: boundary blocks + masked tail store
    ka, kb, kc = jax.random.split(jax.random.fold_in(key, 3), 3)
    w3_, lwn3, b3 = _make_params(ka, 8, 4)
    check(jax.random.normal(kb, (2, 8, 200), jnp.float32),
          jax.random.normal(kc, (2, 4, 150), jnp.float32), w3_, lwn3, b3)

    # 4) forced-tiled lane axis (cdiv grid, masked tail block, Buffered(3) input streams)
    kd, ke, kf = jax.random.split(jax.random.fold_in(key, 4), 3)
    w4_, lwn4, b4 = _make_params(kd, 16, 8)
    check(jax.random.normal(ke, (2, 16, 1664), jnp.float32),
          jax.random.normal(kf, (2, 8, 1664), jnp.float32), w4_, lwn4, b4,
          resid_budget_bytes=256 << 10)

    # 5) forced-tiled + mismatched W: clamped index_map re-reads the short operand's edge block
    kg, kh, ki = jax.random.split(jax.random.fold_in(key, 5), 3)
    w5_, lwn5, b5 = _make_params(kg, 16, 8)
    check(jax.random.normal(kh, (1, 16, 1664), jnp.float32),
          jax.random.normal(ki, (1, 8, 640), jnp.float32), w5_, lwn5, b5,
          resid_budget_bytes=256 << 10)

    print("KERNEL_OK")
</pallas_src>

<mosaic_0001>
module attributes {stable_mosaic.version = 11 : i64} {
  func.func @kernel(%arg0: i32, %arg1: i32, %arg2: memref<8x4xf32, #tpu.memory_space<vmem>>, %arg3: memref<8x1xf32, #tpu.memory_space<vmem>>, %arg4: memref<2x8x16xf32, #tpu.memory_space<vmem>>, %arg5: memref<2x4x16xf32, #tpu.memory_space<vmem>>, %arg6: memref<2x8x16xf32, #tpu.memory_space<vmem>>) attributes {dimension_semantics = [#tpu.dimension_semantics<parallel>, #tpu.dimension_semantics<parallel>], iteration_bounds = array<i64: 1, 1>, scalar_prefetch = 0 : i64, scratch_operands = 0 : i64, tpu.core_type = #tpu.core_type<tc>, window_params = [{pipeline_mode = #tpu.pipeline_mode<synchronous>, transform_indices = @transform_0, window_bounds = array<i64: 8, 4>}, {pipeline_mode = #tpu.pipeline_mode<synchronous>, transform_indices = @transform_1, window_bounds = array<i64: 8, 1>}, {transform_indices = @transform_2, window_bounds = array<i64: 2, 8, 16>}, {transform_indices = @transform_3, window_bounds = array<i64: 2, 4, 16>}, {transform_indices = @transform_4, window_bounds = array<i64: 2, 8, 16>}]} {
    %c0 = arith.constant 0 : index
    %c0_0 = arith.constant 0 : index
    %0 = vector.load %arg2[%c0, %c0_0] : memref<8x4xf32, #tpu.memory_space<vmem>>, vector<8x4xf32>
    %c0_1 = arith.constant 0 : index
    %c0_2 = arith.constant 0 : index
    %1 = vector.load %arg3[%c0_1, %c0_2] : memref<8x1xf32, #tpu.memory_space<vmem>>, vector<8x1xf32>
    %c0_3 = arith.constant 0 : index
    %c0_4 = arith.constant 0 : index
    %c0_5 = arith.constant 0 : index
    %2 = vector.load %arg4[%c0_3, %c0_4, %c0_5] : memref<2x8x16xf32, #tpu.memory_space<vmem>>, vector<1x8x16xf32>
    %3 = vector.shape_cast %2 : vector<1x8x16xf32> to vector<8x16xf32>
    %c0_6 = arith.constant 0 : index
    %c0_7 = arith.constant 0 : index
    %c0_8 = arith.constant 0 : index
    %4 = vector.load %arg5[%c0_6, %c0_7, %c0_8] : memref<2x4x16xf32, #tpu.memory_space<vmem>>, vector<1x4x16xf32>
    %5 = vector.shape_cast %4 : vector<1x4x16xf32> to vector<4x16xf32>
    %cst = arith.constant dense<0.000000e+00> : vector<8x16xf32>
    %6 = tpu.matmul %0, %5, %cst {dimension_numbers = #tpu.dot_dimension_numbers<[1], [0], [0], [1], [0, 0, 1, 1], [], []>} : vector<8x4xf32>, vector<4x16xf32>, vector<8x16xf32> -> vector<8x16xf32>
    %7 = vector.broadcast %1 : vector<8x1xf32> to vector<8x16xf32>
    %8 = arith.addf %6, %7 : vector<8x16xf32>
    %9 = arith.addf %8, %3 : vector<8x16xf32>
    %c0_9 = arith.constant 0 : index
    %c0_10 = arith.constant 0 : index
    %c0_11 = arith.constant 0 : index
    %10 = vector.load %arg6[%c0_9, %c0_10, %c0_11] : memref<2x8x16xf32, #tpu.memory_space<vmem>>, vector<1x8x16xf32>
    %11 = vector.shape_cast %10 : vector<1x8x16xf32> to vector<8x16xf32>
    %12 = vector.shape_cast %9 : vector<8x16xf32> to vector<1x8x16xf32>
    tpu.vector_store %arg6[%c0_9, %c0_10, %c0_11], %12 {strides = array<i32>} : memref<2x8x16xf32, #tpu.memory_space<vmem>>, vector<1x8x16xf32>,
    %c1 = arith.constant 1 : index
    %c0_12 = arith.constant 0 : index
    %c0_13 = arith.constant 0 : index
    %13 = vector.load %arg4[%c1, %c0_12, %c0_13] : memref<2x8x16xf32, #tpu.memory_space<vmem>>, vector<1x8x16xf32>
    %14 = vector.shape_cast %13 : vector<1x8x16xf32> to vector<8x16xf32>
    %c1_14 = arith.constant 1 : index
    %c0_15 = arith.constant 0 : index
    %c0_16 = arith.constant 0 : index
    %15 = vector.load %arg5[%c1_14, %c0_15, %c0_16] : memref<2x4x16xf32, #tpu.memory_space<vmem>>, vector<1x4x16xf32>
    %16 = vector.shape_cast %15 : vector<1x4x16xf32> to vector<4x16xf32>
    %cst_17 = arith.constant dense<0.000000e+00> : vector<8x16xf32>
    %17 = tpu.matmul %0, %16, %cst_17 {dimension_numbers = #tpu.dot_dimension_numbers<[1], [0], [0], [1], [0, 0, 1, 1], [], []>} : vector<8x4xf32>, vector<4x16xf32>, vector<8x16xf32> -> vector<8x16xf32>
    %18 = vector.broadcast %1 : vector<8x1xf32> to vector<8x16xf32>
    %19 = arith.addf %17, %18 : vector<8x16xf32>
    %20 = arith.addf %19, %14 : vector<8x16xf32>
    %c1_18 = arith.constant 1 : index
    %c0_19 = arith.constant 0 : index
    %c0_20 = arith.constant 0 : index
    %21 = vector.load %arg6[%c1_18, %c0_19, %c0_20] : memref<2x8x16xf32, #tpu.memory_space<vmem>>, vector<1x8x16xf32>
    %22 = vector.shape_cast %21 : vector<1x8x16xf32> to vector<8x16xf32>
    %23 = vector.shape_cast %20 : vector<8x16xf32> to vector<1x8x16xf32>
    tpu.vector_store %arg6[%c1_18, %c0_19, %c0_20], %23 {strides = array<i32>} : memref<2x8x16xf32, #tpu.memory_space<vmem>>, vector<1x8x16xf32>,
    return
  }
  func.func @transform_0(%arg0: i32, %arg1: i32) -> (i32, i32) {
    %c0_i32 = arith.constant 0 : i32
    %c0_i32_0 = arith.constant 0 : i32
    %c0_i32_1 = arith.constant 0 : i32
    return %c0_i32, %c0_i32_0 : i32, i32
  }
  func.func @transform_1(%arg0: i32, %arg1: i32) -> (i32, i32) {
    %c0_i32 = arith.constant 0 : i32
    %c0_i32_0 = arith.constant 0 : i32
    %c0_i32_1 = arith.constant 0 : i32
    return %c0_i32, %c0_i32_0 : i32, i32
  }
  func.func @transform_2(%arg0: i32, %arg1: i32) -> (i32, i32, i32) {
    %c0_i32 = arith.constant 0 : i32
    %c0_i32_0 = arith.constant 0 : i32
    return %arg0, %c0_i32, %arg1 : i32, i32, i32
  }
  func.func @transform_3(%arg0: i32, %arg1: i32) -> (i32, i32, i32) {
    %c0_i32 = arith.constant 0 : i32
    %c0_i32_0 = arith.constant 0 : i32
    return %arg0, %c0_i32, %arg1 : i32, i32, i32
  }
  func.func @transform_4(%arg0: i32, %arg1: i32) -> (i32, i32, i32) {
    %c0_i32 = arith.constant 0 : i32
    %c0_i32_0 = arith.constant 0 : i32
    return %arg0, %c0_i32, %arg1 : i32, i32, i32
  }
}

</mosaic_0001>

<llo_original>
// kernel: tpu_custom_call.1
$region0: #{tpu_custom_call.1}
  #allocation0 [shape = 'u32[]', space=smem, size = 0x4, offset = 0x4, fixed_abs, tag = 'smem constant byte address 0x4 - core index']
  #allocation1 [shape = 'u32[144,128]{1,0:T(1,128)}', space=vmem, size = 0x12000, scoped, tag = 'internal scratch']
  %s0 = inlined_call_operand.vmem [shape: f32[8,4], index: 0, kind: input, shape index: {}]
  %s1 = inlined_call_operand.vmem [shape: f32[8,1], index: 1, kind: input, shape index: {}]
  %s2 = inlined_call_operand.vmem [shape: f32[2,8,16], index: 2, kind: input, shape index: {}]
  %s3 = inlined_call_operand.vmem [shape: f32[2,4,16], index: 3, kind: input, shape index: {}]
  %s4 = inlined_call_operand.hbm [shape: f32[2,8,16], index: 4, kind: output, shape index: {}]
  %s5 = sld [smem:[#allocation0]]
  $region26: #{tpu_custom_call.1} parent=0
    _
  %s7 = ssub.s32 1, %s5
  %s8 = scalar_select 0, %s7, %s5
  $region1: #{tpu_custom_call.1} parent=0
    #allocation2 [shape = 'u8[8192]{0}', space=vmem, size = 0x2000, scoped, tag = 'output window, operand 0, single buffered']
    #allocation3 [shape = 's32[1]{0}', space=sflag, size = 0x4, scoped, tag = 'scoped memory for tpu_custom_call.1']
    %9 = vsyncpa [#allocation3], 0
    // Predicated region
    $region2: #{tpu_custom_call.1} parent=1 // pred_check
      _
    $region3: #{tpu_custom_call.1} parent=1 // pred_check_branch
      %11 = sbr.rel (0) target = $region5
    $region4: #{tpu_custom_call.1} parent=1 // pred_region
      _
    $region5: #{tpu_custom_call.1} parent=1 // pred_fallthru
      _
    // Predicated region
    $region6: #{tpu_custom_call.1} parent=1 // pred_check
      _
    $region7: #{tpu_custom_call.1} parent=1 // pred_check_branch
      %13 = sbr.rel (0) target = $region9
    $region8: #{tpu_custom_call.1} parent=1 // pred_region
      _
    $region9: #{tpu_custom_call.1} parent=1 // pred_fallthru
      _
    // Predicated region
    $region10: #{tpu_custom_call.1} parent=1 // pred_check
      _
    $region11: #{tpu_custom_call.1} parent=1 // pred_check_branch
      %15 = sbr.rel (0) target = $region13
    $region12: #{tpu_custom_call.1} parent=1 // pred_region
      _
    $region13: #{tpu_custom_call.1} parent=1 // pred_fallthru
      _
    // Predicated region
    $region14: #{tpu_custom_call.1} parent=1 // pred_check
      _
    $region15: #{tpu_custom_call.1} parent=1 // pred_check_branch
      %17 = sbr.rel (0) target = $region17
    $region16: #{tpu_custom_call.1} parent=1 // pred_region
      _
    $region17: #{tpu_custom_call.1} parent=1 // pred_fallthru
      _
    %v18 = vld [vmem:[%s0] sm:$0xff]
    %v19 = vld [vmem:[%s1] sm:$0xff]
    %v20 = vld [vmem:[%s2] sm:$0xff]
    %v21 = vld [vmem:[%s3] sm:$0xf]
    %23 = vset.pattern.permute.xlu0 0
    %24 = vperm.xlu0 %23, %v19
    %v25 = vpop.permute.xlu0 %24
    %vm27 = vcmask 31744
    %v29 = vsel %vm27, %v18, 0
    %vm31 = vcmask 1043456
    %v33 = vsel %vm31, %v21, 0
    %35 = vmatprep.subr.mxu0 0.0
    %36 = vmatpush1.msra.mxu0 %v33
    %37 = vmatprep.subr.mxu0 0.0
    %38 = vmatpush1.msra.mxu0 0.0
    %39 = vmatprep.subr.mxu0 0.0
    %40 = vmatpush1.msra.mxu0 0.0
    %41 = vmatprep.subr.mxu0 0.0
    %42 = vmatpush1.msra.mxu0 0.0
    %43 = vmatprep.subr.mxu0 0.0
    %44 = vmatpush1.msra.mxu0 0.0
    %45 = vmatprep.subr.mxu0 0.0
    %46 = vmatpush1.msra.mxu0 0.0
    %47 = vmatprep.subr.mxu0 0.0
    %48 = vmatpush1.msra.mxu0 0.0
    %49 = vmatprep.subr.mxu0 0.0
    %50 = vmatpush1.msra.mxu0 0.0
    %51 = vmatprep.subr.mxu0 0.0
    %52 = vmatpush1.msra.mxu0 0.0
    %53 = vmatprep.subr.mxu0 0.0
    %54 = vmatpush1.msra.mxu0 0.0
    %55 = vmatprep.subr.mxu0 0.0
    %56 = vmatpush1.msra.mxu0 0.0
    %57 = vmatprep.subr.mxu0 0.0
    %58 = vmatpush1.msra.mxu0 0.0
    %59 = vmatprep.subr.mxu0 0.0
    %60 = vmatpush1.msra.mxu0 0.0
    %61 = vmatprep.subr.mxu0 0.0
    %62 = vmatpush1.msra.mxu0 0.0
    %63 = vmatprep.subr.mxu0 0.0
    %64 = vmatpush1.msra.mxu0 0.0
    %65 = vmatprep.subr.mxu0 0.0
    %66 = vmatpush1.msra.mxu0 0.0
    %67 = vmatprep.subr.mxu0 0.0
    %68 = vmatpush1.msra.mxu0 0.0
    %69 = vmatprep.subr.mxu0 0.0
    %70 = vmatpush1.msra.mxu0 0.0
    %71 = vmatprep.subr.mxu0 0.0
    %72 = vmatpush1.msra.mxu0 0.0
    %73 = vmatprep.subr.mxu0 0.0
    %74 = vmatpush1.msra.mxu0 0.0
    %75 = vmatprep.subr.mxu0 0.0
    %76 = vmatpush1.msra.mxu0 0.0
    %77 = vmatprep.subr.mxu0 0.0
    %78 = vmatpush1.msra.mxu0 0.0
    %79 = vmatprep.subr.mxu0 0.0
    %80 = vmatpush1.msra.mxu0 0.0
    %81 = vmatprep.subr.mxu0 0.0
    %82 = vmatpush1.msra.mxu0 0.0
    %83 = vmatprep.subr.mxu0 0.0
    %84 = vmatpush1.msra.mxu0 0.0
    %85 = vmatprep.subr.mxu0 0.0
    %86 = vmatpush1.msra.mxu0 0.0
    %87 = vmatprep.subr.mxu0 0.0
    %88 = vmatpush1.msra.mxu0 0.0
    %89 = vmatprep.subr.mxu0 0.0
    %90 = vmatpush1.msra.mxu0 0.0
    %91 = vmatprep.subr.mxu0 0.0
    %92 = vmatpush1.msra.mxu0 0.0
    %93 = vmatprep.subr.mxu0 0.0
    %94 = vmatpush1.msra.mxu0 0.0
    %95 = vmatprep.subr.mxu0 0.0
    %96 = vmatpush1.msra.mxu0 0.0
    %97 = vmatprep.subr.mxu0 0.0
    %98 = vmatpush1.msra.mxu0 0.0
    %99 = vmatprep.mubr.f32.mxu0 0.0
    %100 = vmatmul.mubr.f32.gmra.mrb[0].mxu0 %v29
    %v101 = vpop.f32.mrb[0].mxu0
    %v102 = vadd.f32 %v25, %v101
    %v103 = vpop.f32.mrb[0].mxu0
    %104 = vdwg.mxu0
    %v105 = vadd.f32 %v102, %v20
    %vm106 = vcmask 130048
    %107 = vst.msk [vmem:[#allocation2] sm:$0xff] %vm106, %v105
    %s108 = scalar_lea.vmem %s2, 8
    %v109 = vld [vmem:[%s108] sm:$0xff]
    %s110 = scalar_lea.vmem %s3, 4
    %v111 = vld [vmem:[%s110] sm:$0xf]
    %v113 = vsel %vm31, %v111, 0
    %115 = vmatprep.subr.mxu0 0.0
    %116 = vmatpush1.msra.mxu0 %v113
    %117 = vmatprep.subr.mxu0 0.0
    %118 = vmatpush1.msra.mxu0 0.0
    %119 = vmatprep.subr.mxu0 0.0
    %120 = vmatpush1.msra.mxu0 0.0
    %121 = vmatprep.subr.mxu0 0.0
    %122 = vmatpush1.msra.mxu0 0.0
    %123 = vmatprep.subr.mxu0 0.0
    %124 = vmatpush1.msra.mxu0 0.0
    %125 = vmatprep.subr.mxu0 0.0
    %126 = vmatpush1.msra.mxu0 0.0
    %127 = vmatprep.subr.mxu0 0.0
    %128 = vmatpush1.msra.mxu0 0.0
    %129 = vmatprep.subr.mxu0 0.0
    %130 = vmatpush1.msra.mxu0 0.0
    %131 = vmatprep.subr.mxu0 0.0
    %132 = vmatpush1.msra.mxu0 0.0
    %133 = vmatprep.subr.mxu0 0.0
    %134 = vmatpush1.msra.mxu0 0.0
    %135 = vmatprep.subr.mxu0 0.0
    %136 = vmatpush1.msra.mxu0 0.0
    %137 = vmatprep.subr.mxu0 0.0
    %138 = vmatpush1.msra.mxu0 0.0
    %139 = vmatprep.subr.mxu0 0.0
    %140 = vmatpush1.msra.mxu0 0.0
    %141 = vmatprep.subr.mxu0 0.0
    %142 = vmatpush1.msra.mxu0 0.0
    %143 = vmatprep.subr.mxu0 0.0
    %144 = vmatpush1.msra.mxu0 0.0
    %145 = vmatprep.subr.mxu0 0.0
    %146 = vmatpush1.msra.mxu0 0.0
    %147 = vmatprep.subr.mxu0 0.0
    %148 = vmatpush1.msra.mxu0 0.0
    %149 = vmatprep.subr.mxu0 0.0
    %150 = vmatpush1.msra.mxu0 0.0
    %151 = vmatprep.subr.mxu0 0.0
    %152 = vmatpush1.msra.mxu0 0.0
    %153 = vmatprep.subr.mxu0 0.0
    %154 = vmatpush1.msra.mxu0 0.0
    %155 = vmatprep.subr.mxu0 0.0
    %156 = vmatpush1.msra.mxu0 0.0
    %157 = vmatprep.subr.mxu0 0.0
    %158 = vmatpush1.msra.mxu0 0.0
    %159 = vmatprep.subr.mxu0 0.0
    %160 = vmatpush1.msra.mxu0 0.0
    %161 = vmatprep.subr.mxu0 0.0
    %162 = vmatpush1.msra.mxu0 0.0
    %163 = vmatprep.subr.mxu0 0.0
    %164 = vmatpush1.msra.mxu0 0.0
    %165 = vmatprep.subr.mxu0 0.0
    %166 = vmatpush1.msra.mxu0 0.0
    %167 = vmatprep.subr.mxu0 0.0
    %168 = vmatpush1.msra.mxu0 0.0
    %169 = vmatprep.subr.mxu0 0.0
    %170 = vmatpush1.msra.mxu0 0.0
    %171 = vmatprep.subr.mxu0 0.0
    %172 = vmatpush1.msra.mxu0 0.0
    %173 = vmatprep.subr.mxu0 0.0
    %174 = vmatpush1.msra.mxu0 0.0
    %175 = vmatprep.subr.mxu0 0.0
    %176 = vmatpush1.msra.mxu0 0.0
    %177 = vmatprep.subr.mxu0 0.0
    %178 = vmatpush1.msra.mxu0 0.0
    %179 = vmatprep.mubr.f32.mxu0 0.0
    %180 = vmatmul.mubr.f32.gmra.mrb[0].mxu0 %v29
    %v181 = vpop.f32.mrb[0].mxu0
    %v182 = vadd.f32 %v25, %v181
    %v183 = vpop.f32.mrb[0].mxu0
    %184 = vdwg.mxu0
    %v185 = vadd.f32 %v182, %v109
    %s186 = scalar_lea.vmem [#allocation2], 8
    %187 = vst.msk [vmem:[%s186] sm:$0xff] %vm106, %v185
    // Predicated region
    $region18: #{tpu_custom_call.1} parent=1 // pred_check
      _
    $region19: #{tpu_custom_call.1} parent=1 // pred_check_branch
      %189 = sbr.rel (0) target = $region21
    $region20: #{tpu_custom_call.1} parent=1 // pred_region
      %s191 = ssub.s32 256, 256
      %192 = vsyncadd [#allocation3], %s191
      %s193 = sshll.u32 [#allocation2], 4
      %s194 = int_to_ptr.vmem [resolvable:$true] %s193
      %199 = dma.vmem_to_hbm [thread:$0]  %s194, 256, %s4, [#allocation3], 128, 128, 8
    $region21: #{tpu_custom_call.1} parent=1 // pred_fallthru
      _
    // Predicated region
    $region22: #{tpu_custom_call.1} parent=1 // pred_check
      _
    $region23: #{tpu_custom_call.1} parent=1 // pred_check_branch
      %201 = sbr.rel (0) target = $region25
    $region24: #{tpu_custom_call.1} parent=1 // pred_region
      %202 = dma.done [#allocation3], 256
    $region25: #{tpu_custom_call.1} parent=1 // pred_fallthru
      _
    %203 = vsyncpa [#allocation3], 1

</llo_original>
